<compile_context>
chip_gen: v7x
topology: tpu7x:2x2x1
jax: 0.10.0
libtpu: 0.0.40
codegen_flags: <defaults>
</compile_context>

<pallas_src>
import numpy as np
import jax
import jax.numpy as jnp
from jax.experimental import pallas as pl
from jax.experimental.pallas import tpu as pltpu


# --------------------------------------------------------------------------
# The real identity: no kernel, no HBM traffic.  Prefer this at call sites.
# --------------------------------------------------------------------------
def identity(x: jax.Array) -> jax.Array:
    """True identity.  The optimal implementation is no kernel at all."""
    return x


# --------------------------------------------------------------------------
# Kernel variant: direct HBM->HBM DMA copy (use only when a materialized
# copy / explicit fusion point is actually needed).
# --------------------------------------------------------------------------
_MAX_OUTSTANDING_DMAS = 4
_MIN_BYTES_PER_CHUNK = 1 << 20  # don't split below ~1 MiB per DMA


def _make_dma_copy_kernel(chunks):
    """Build a kernel issuing one HBM->HBM DMA per (start, size) chunk.

    `chunks` is a static Python list of (start, size) pairs along axis 0.
    All DMAs are started before any wait so they are outstanding together.
    """
    n = len(chunks)

    def kernel(x_ref, o_ref, sems):
        copies = []
        if n == 1:
            # Whole-array copy: full refs, single semaphore.
            copies.append(pltpu.make_async_copy(x_ref, o_ref, sems.at[0]))
        else:
            for i, (start, size) in enumerate(chunks):
                copies.append(
                    pltpu.make_async_copy(
                        x_ref.at[pl.ds(start, size)],
                        o_ref.at[pl.ds(start, size)],
                        sems.at[i],
                    )
                )
        for cp in copies:
            cp.start()
        for cp in copies:
            cp.wait()

    return kernel, pltpu.SemaphoreType.DMA((n,))


@jax.jit
def _identity_copy(x: jax.Array) -> jax.Array:
    total = x.size
    itemsize = np.dtype(x.dtype).itemsize
    total_bytes = total * itemsize
    leading = x.shape[0]

    # Decide (statically, per trace) how many outstanding DMAs to issue.
    n_chunks = 1
    if leading >= 2 and total_bytes >= 2 * _MIN_BYTES_PER_CHUNK:
        n_chunks = int(
            min(leading, _MAX_OUTSTANDING_DMAS, total_bytes // _MIN_BYTES_PER_CHUNK)
        )
        n_chunks = max(n_chunks, 1)

    base, rem = divmod(leading, n_chunks)
    chunks, start = [], 0
    for i in range(n_chunks):
        size = base + (1 if i < rem else 0)
        chunks.append((start, size))
        start += size

    kernel, sem_spec = _make_dma_copy_kernel(chunks)

    return pl.pallas_call(
        kernel,
        out_shape=jax.ShapeDtypeStruct(x.shape, x.dtype),
        in_specs=[pl.BlockSpec(memory_space=pl.ANY)],   # raw HBM ref, no auto-DMA
        out_specs=pl.BlockSpec(memory_space=pl.ANY),    # raw HBM ref, no auto-DMA
        scratch_shapes=[sem_spec],
        cost_estimate=pl.CostEstimate(
            flops=0, transcendentals=0, bytes_accessed=2 * total_bytes
        ),
    )(x)


def identity_pallas(x: jax.Array) -> jax.Array:
    """Identity materialized as a fresh HBM buffer via direct HBM->HBM DMA.

    Pays 2x the tensor size in HBM traffic (read + write) by construction;
    call `identity()` instead unless you really need a materialized copy.
    """
    x = jnp.asarray(x)
    if x.ndim == 0 or x.size == 0:
        # Nothing to DMA; returning x is an exact identity.
        return x
    return _identity_copy(x)


if __name__ == "__main__":
    key = jax.random.PRNGKey(0)
    # Small NCHW input consistent with the module's intended use (images).
    x = jax.random.normal(key, (2, 4, 16, 16), dtype=jnp.float32)
    expected = jax.device_get(x)

    y = identity_pallas(x)
    jax.block_until_ready(y)

    assert y.shape == x.shape, (y.shape, x.shape)
    assert y.dtype == x.dtype, (y.dtype, x.dtype)
    assert np.array_equal(jax.device_get(y), expected), "identity kernel output mismatch"

    # The zero-cost path (the "real" identity) is also exposed.
    z = identity(x)
    assert z is x

    print("KERNEL_OK")
</pallas_src>

<mosaic_0001>
module attributes {stable_mosaic.version = 11 : i64} {
  func.func @kernel(%arg0: memref<2x4x16x16xf32, #tpu.memory_space<any>>, %arg1: memref<2x4x16x16xf32, #tpu.memory_space<any>>, %arg2: memref<1x!tpu.dma_semaphore, #tpu.memory_space<semaphore_mem>>) attributes {dimension_semantics = [], scalar_prefetch = 0 : i64, scratch_operands = 1 : i64, tpu.core_type = #tpu.core_type<tc>} {
    %c0_i32 = arith.constant 0 : i32
    %0 = tpu.memref_slice %arg2[%c0_i32] : memref<1x!tpu.dma_semaphore, #tpu.memory_space<semaphore_mem>> -> memref<1x!tpu.dma_semaphore, #tpu.memory_space<semaphore_mem>>
    %1 = tpu.memref_squeeze %0 : memref<1x!tpu.dma_semaphore, #tpu.memory_space<semaphore_mem>> -> memref<!tpu.dma_semaphore, #tpu.memory_space<semaphore_mem>>
    tpu.enqueue_dma source(%arg0 : memref<2x4x16x16xf32, #tpu.memory_space<any>>) target(%arg1 : memref<2x4x16x16xf32, #tpu.memory_space<any>>) target_semaphore(%1 : memref<!tpu.dma_semaphore, #tpu.memory_space<semaphore_mem>>)
    %c0_i32_0 = arith.constant 0 : i32
    %2 = tpu.memref_slice %arg2[%c0_i32_0] : memref<1x!tpu.dma_semaphore, #tpu.memory_space<semaphore_mem>> -> memref<1x!tpu.dma_semaphore, #tpu.memory_space<semaphore_mem>>
    %3 = tpu.memref_squeeze %2 : memref<1x!tpu.dma_semaphore, #tpu.memory_space<semaphore_mem>> -> memref<!tpu.dma_semaphore, #tpu.memory_space<semaphore_mem>>
    tpu.wait_dma2 semaphore(%3 : memref<!tpu.dma_semaphore, #tpu.memory_space<semaphore_mem>>) src(%arg0 : memref<2x4x16x16xf32, #tpu.memory_space<any>>) dst(%arg1 : memref<2x4x16x16xf32, #tpu.memory_space<any>>)
    return
  }
}

</mosaic_0001>

<llo_original>
// kernel: _identity_copy.1
$region0: #{_identity_copy.1}
  #allocation0 [shape = 'u32[]', space=smem, size = 0x4, offset = 0x4, fixed_abs, tag = 'smem constant byte address 0x4 - core index']
  #allocation1 [shape = 'u32[144,128]{1,0:T(1,128)}', space=vmem, size = 0x12000, scoped, tag = 'internal scratch']
  #allocation2 [shape = 's32[1]{0}', space=sflag, size = 0x4, scoped, tag = 'scratch operand']
  #allocation3 [shape = 's32[]', space=sflag, size = 0x4, offset = 0, fixed_abs, tag = 'sflag constant byte address 0x0 - dummy sync flag']
  #allocation4 [shape = 'u32[0]{0}', space=smem, size = 0, offset = 0, fixed_abs, tag = 'smem constant byte address 0x0 - null']
  %s0 = inlined_call_operand.hbm [shape: f32[2,4,16,16], index: 0, kind: input, shape index: {}]
  %s1 = inlined_call_operand.hbm [shape: f32[2,4,16,16], index: 1, kind: output, shape index: {}]
  %s2 = sld [smem:[#allocation0]]
  $region2: #{_identity_copy.1} parent=0
    _
  %s4 = ssub.s32 1, %s2
  %s5 = scalar_select 0, %s4, %s2
  %s7 = sshll.u32 1, 14
  %s8 = sxor.u32 4294967295, %s7
  %s11 = sshll.u32 3, 24
  %s12 = sxor.u32 4294967295, %s11
  %s13 = sand.u32 0, %s12
  %s15 = sor.u32 %s13, 0
  %18 = dma.general %s0, 2048, %s1, [#allocation2], [#allocation3], [#allocation4], %s15, 0
  %s19 = smul.u32 2, 4
  %s20 = smul.u32 %s19, 16
  %s21 = smul.u32 %s20, 1
  %s22 = sshll.u32 %s21, 4
  %23 = dma.done [#allocation2], %s22
  %24 = vsyncmov [#allocation2]
  %s25 = vpop.sfrf %24
  %p26 = scmp.eq.s32.totalorder %s25, 0
  %p27 = pneg %p26
  %29 = shalt.err (%p27)

</llo_original>
